<compile_context>
chip_gen: v7x
topology: tpu7x:2x2x1
jax: 0.10.0
libtpu: 0.0.40
codegen_flags: <defaults>
</compile_context>

<pallas_src>
import jax
import jax.numpy as jnp
from jax.experimental import pallas as pl
from jax.experimental.pallas import tpu as pltpu


def channel_w_kernel(w_ref, x_ref, o_ref):
    # w_ref: (TM, 1) per-row scales (compute dtype); x_ref/o_ref: (TM, TK).
    # Broadcast multiply along the lane axis (pure VPU, memory-bound kernel).
    o_ref[...] = x_ref[...].astype(o_ref.dtype) * w_ref[...]


def _round_up(v, m):
    return ((v + m - 1) // m) * m


def channel_w_forward(x, w1, *, target_block_bytes=4 * 1024 * 1024):
    """Per-channel scaling: out[n, c, h, w] = w1[0, c, 0, 0] * x[n, c, h, w]."""
    N, C, H, W = x.shape
    assert w1.shape == (1, C, 1, 1)

    R = N * C          # rows of the flattened view
    K = H * W          # lane-dense trailing axis

    # PyTorch type promotion: out dtype = promote(w1.dtype, x.dtype). Keep the
    # scale at full (promoted) precision; only the product is in that dtype.
    compute_dtype = jnp.promote_types(x.dtype, w1.dtype)

    # Free reshape for contiguous NCHW; pad trailing axis to a 128 multiple so
    # stores stay lane-dense.
    x2 = x.reshape(R, K)
    K_pad = _round_up(K, 128)
    if K_pad != K:
        x2 = jnp.pad(x2, ((0, 0), (0, K_pad - K)))

    # Per-row scale column: row r = (n, c) uses w1[0, c, 0, 0].
    w_col = jnp.broadcast_to(w1.reshape(1, C), (N, C)).reshape(R, 1).astype(compute_dtype)

    x_isz = jnp.dtype(x.dtype).itemsize
    o_isz = jnp.dtype(compute_dtype).itemsize
    w_isz = jnp.dtype(compute_dtype).itemsize

    # Dtype-aware sublane granularity: f32 -> 8, bf16 -> 16, int8/fp8 -> 32.
    sub = max(8, 32 // min(x_isz, o_isz))

    # K tiling: biggest multiple of 128 such that a minimal (sub, tk) x-tile
    # stays within the per-tile budget (handles very large H*W).
    tk = min(K_pad, max(128, (target_block_bytes // (sub * x_isz) // 128) * 128))
    grid_k = pl.cdiv(K_pad, tk)

    # Row tiling: ~target_block_bytes per x-tile.
    tm = max(sub, (target_block_bytes // (tk * x_isz) // sub) * sub)
    tm = min(tm, _round_up(R, sub))

    # v7x megacore: guarantee >= 2 parallel grid steps when there is enough
    # work to split across the 2 TensorCores (free on 1-TC chips).
    if grid_k == 1 and R >= 2 * sub and R * K_pad * x_isz >= 4 * 1024 * 1024:
        tm = min(tm, _round_up(pl.cdiv(R, 2), sub))

    # VMEM estimate: double-buffered x + out tiles plus the lane-padded (tm, 1)
    # scale block (tm * 128 * itemsize per buffer in VMEM, despite 4 B/row in HBM).
    def vmem_estimate(tm_, tk_):
        return 2 * (tm_ * tk_ * (x_isz + o_isz) + tm_ * 128 * w_isz)

    # Safety shrink so the total stays comfortably under v7x's 64 MiB physical VMEM.
    while vmem_estimate(tm, tk) > 40 * 1024 * 1024 and tm > sub:
        tm = max(sub, ((tm // 2) // sub) * sub)

    grid_rows = pl.cdiv(R, tm)
    grid = (grid_rows, grid_k)

    vmem_limit = int(min(vmem_estimate(tm, tk) + (2 << 20), 48 * 1024 * 1024))

    out2 = pl.pallas_call(
        channel_w_kernel,
        out_shape=jax.ShapeDtypeStruct((R, K_pad), compute_dtype),
        grid_spec=pltpu.PrefetchScalarGridSpec(
            num_scalar_prefetch=0,
            grid=grid,
            in_specs=[
                # per-row scale block; constant over j -> fetched once per row block
                pl.BlockSpec((tm, 1), lambda i, j: (i, 0)),
                # activation tile
                pl.BlockSpec((tm, tk), lambda i, j: (i, j)),
            ],
            out_specs=pl.BlockSpec((tm, tk), lambda i, j: (i, j)),
        ),
        compiler_params=pltpu.CompilerParams(
            dimension_semantics=("parallel", "parallel"),
            vmem_limit_bytes=vmem_limit,
        ),
    )(w_col, x2)

    if K_pad != K:
        out2 = out2[:, :K]
    return out2.reshape(N, C, H, W)


if __name__ == "__main__":
    key = jax.random.PRNGKey(0)
    k_w, k_x = jax.random.split(key)

    N, C, H, W = 2, 4, 16, 16
    # Parameter init mirrors torch.rand(1, out_ch, 1, 1) * 0.1 (uniform [0, 0.1))
    w1 = jax.random.uniform(k_w, (1, C, 1, 1), dtype=jnp.float32) * 0.1
    x = jax.random.normal(k_x, (N, C, H, W), dtype=jnp.float32)

    out = channel_w_forward(x, w1)
    out = jax.block_until_ready(out)

    # Reference check (plain JAX broadcasting, same semantics as PyTorch)
    ref = w1 * x
    assert out.shape == x.shape
    assert out.dtype == ref.dtype
    assert jnp.allclose(out, ref, atol=1e-6, rtol=1e-6)

    print("KERNEL_OK")
</pallas_src>

<mosaic_0001>
module attributes {stable_mosaic.version = 11 : i64} {
  func.func @channel_w_kernel(%arg0: i32, %arg1: i32, %arg2: memref<8x1xf32, #tpu.memory_space<vmem>>, %arg3: memref<8x256xf32, #tpu.memory_space<vmem>>, %arg4: memref<8x256xf32, #tpu.memory_space<vmem>>) attributes {dimension_semantics = [#tpu.dimension_semantics<parallel>, #tpu.dimension_semantics<parallel>], iteration_bounds = array<i64: 1, 1>, scalar_prefetch = 0 : i64, scratch_operands = 0 : i64, tpu.core_type = #tpu.core_type<tc>, window_params = [{transform_indices = @transform_0, window_bounds = array<i64: 8, 1>}, {transform_indices = @transform_1, window_bounds = array<i64: 8, 256>}, {transform_indices = @transform_2, window_bounds = array<i64: 8, 256>}]} {
    %c0 = arith.constant 0 : index
    %c0_0 = arith.constant 0 : index
    %0 = vector.load %arg3[%c0, %c0_0] : memref<8x256xf32, #tpu.memory_space<vmem>>, vector<8x256xf32>
    %c0_1 = arith.constant 0 : index
    %c0_2 = arith.constant 0 : index
    %1 = vector.load %arg2[%c0_1, %c0_2] : memref<8x1xf32, #tpu.memory_space<vmem>>, vector<8x1xf32>
    %2 = vector.broadcast %1 : vector<8x1xf32> to vector<8x256xf32>
    %3 = arith.mulf %0, %2 : vector<8x256xf32>
    %c0_3 = arith.constant 0 : index
    %c0_4 = arith.constant 0 : index
    %4 = vector.load %arg4[%c0_3, %c0_4] : memref<8x256xf32, #tpu.memory_space<vmem>>, vector<8x256xf32>
    tpu.vector_store %arg4[%c0_3, %c0_4], %3 {strides = array<i32>} : memref<8x256xf32, #tpu.memory_space<vmem>>, vector<8x256xf32>,
    return
  }
  func.func @transform_0(%arg0: i32, %arg1: i32) -> (i32, i32) {
    %c0_i32 = arith.constant 0 : i32
    %c0_i32_0 = arith.constant 0 : i32
    return %arg0, %c0_i32 : i32, i32
  }
  func.func @transform_1(%arg0: i32, %arg1: i32) -> (i32, i32) {
    %c0_i32 = arith.constant 0 : i32
    return %arg0, %arg1 : i32, i32
  }
  func.func @transform_2(%arg0: i32, %arg1: i32) -> (i32, i32) {
    %c0_i32 = arith.constant 0 : i32
    return %arg0, %arg1 : i32, i32
  }
}

</mosaic_0001>

<llo_original>
// kernel: tpu_custom_call.1
$region0: #{tpu_custom_call.1}
  #allocation0 [shape = 'u32[]', space=smem, size = 0x4, offset = 0x4, fixed_abs, tag = 'smem constant byte address 0x4 - core index']
  #allocation1 [shape = 'u32[144,128]{1,0:T(1,128)}', space=vmem, size = 0x12000, scoped, tag = 'internal scratch']
  %s0 = inlined_call_operand.vmem [shape: f32[8,1], index: 0, kind: input, shape index: {}]
  %s1 = inlined_call_operand.hbm [shape: f32[8,256], index: 1, kind: input, shape index: {}]
  %s2 = inlined_call_operand.hbm [shape: f32[8,256], index: 2, kind: output, shape index: {}]
  %s3 = sld [smem:[#allocation0]]
  $region22: #{tpu_custom_call.1} parent=0
    _
  %s5 = ssub.s32 1, %s3
  %s6 = scalar_select 0, %s5, %s3
  $region1: #{tpu_custom_call.1} parent=0
    #allocation2 [shape = 'u8[8192]{0}', space=vmem, size = 0x2000, scoped, tag = 'input window, operand 1, single buffered']
    #allocation3 [shape = 's32[1]{0}', space=sflag, size = 0x4, scoped, tag = 'scoped memory for tpu_custom_call.1']
    #allocation4 [shape = 's32[1]{0}', space=sflag, size = 0x4, scoped, tag = 'scoped memory for tpu_custom_call.1']
    #allocation5 [shape = 'u8[8192]{0}', space=vmem, size = 0x2000, scoped, tag = 'output window, operand 0, single buffered']
    %7 = vsyncpa [#allocation3], 0
    %8 = vsyncpa [#allocation4], 0
    // Predicated region
    $region2: #{tpu_custom_call.1} parent=1 // pred_check
      _
    $region3: #{tpu_custom_call.1} parent=1 // pred_check_branch
      %10 = sbr.rel (0) target = $region5
    $region4: #{tpu_custom_call.1} parent=1 // pred_region
      _
    $region5: #{tpu_custom_call.1} parent=1 // pred_fallthru
      _
    // Predicated region
    $region6: #{tpu_custom_call.1} parent=1 // pred_check
      _
    $region7: #{tpu_custom_call.1} parent=1 // pred_check_branch
      %12 = sbr.rel (0) target = $region9
    $region8: #{tpu_custom_call.1} parent=1 // pred_region
      %s14 = ssub.s32 256, 256
      %15 = vsyncadd [#allocation3], %s14
      %s17 = sshll.u32 [#allocation2], 4
      %s18 = int_to_ptr.vmem [resolvable:$true] %s17
      %20 = dma.hbm_to_vmem [thread:$0]  %s1, 256, %s18, [#allocation3]
    $region9: #{tpu_custom_call.1} parent=1 // pred_fallthru
      _
    // Predicated region
    $region10: #{tpu_custom_call.1} parent=1 // pred_check
      _
    $region11: #{tpu_custom_call.1} parent=1 // pred_check_branch
      %22 = sbr.rel (0) target = $region13
    $region12: #{tpu_custom_call.1} parent=1 // pred_region
      %23 = dma.done [#allocation3], 256
    $region13: #{tpu_custom_call.1} parent=1 // pred_fallthru
      _
    %v24 = vld [vmem:[#allocation2] sm:$0xff]
    %v25 = vld [vmem:[#allocation2 + $0x8] sm:$0xff]
    %v26 = vld [vmem:[%s0] sm:$0xff]
    %28 = vset.pattern.permute.xlu0 0
    %29 = vperm.xlu0 %28, %v26
    %v30 = vpop.permute.xlu0 %29
    %v32 = vmul.f32 %v24, %v30
    %v33 = vmul.f32 %v25, %v30
    %34 = vst [vmem:[#allocation5] sm:$0xff] %v32
    %35 = vst [vmem:[#allocation5 + $0x8] sm:$0xff] %v33
    // Predicated region
    $region14: #{tpu_custom_call.1} parent=1 // pred_check
      _
    $region15: #{tpu_custom_call.1} parent=1 // pred_check_branch
      %37 = sbr.rel (0) target = $region17
    $region16: #{tpu_custom_call.1} parent=1 // pred_region
      %s39 = ssub.s32 256, 256
      %40 = vsyncadd [#allocation4], %s39
      %s42 = sshll.u32 [#allocation5], 4
      %s43 = int_to_ptr.vmem [resolvable:$true] %s42
      %45 = dma.vmem_to_hbm [thread:$0]  %s43, 256, %s2, [#allocation4]
    $region17: #{tpu_custom_call.1} parent=1 // pred_fallthru
      _
    // Predicated region
    $region18: #{tpu_custom_call.1} parent=1 // pred_check
      _
    $region19: #{tpu_custom_call.1} parent=1 // pred_check_branch
      %47 = sbr.rel (0) target = $region21
    $region20: #{tpu_custom_call.1} parent=1 // pred_region
      %48 = dma.done [#allocation4], 256
    $region21: #{tpu_custom_call.1} parent=1 // pred_fallthru
      _
    %49 = vsyncpa [#allocation3], 1
    %50 = vsyncpa [#allocation4], 1

</llo_original>
